<compile_context>
chip_gen: v5e
topology: v5e:2x2
jax: 0.10.0
libtpu: 0.0.40
codegen_flags: <defaults>
</compile_context>

<pallas_src>
import functools

import jax
import jax.numpy as jnp
from jax.experimental import pallas as pl
from jax.experimental.pallas import tpu as pltpu


# ----------------------------------------------------------------------------
# Pallas kernel: single program, fully fused.
# ----------------------------------------------------------------------------
def label_smoothing_kernel(x_ref, tgt_ref, loss_ref, tdist_ref, *,
                           size, padding_idx, smoothing):
    x = x_ref[...]                                    # (N, V) f32 log-probs
    tgt = tgt_ref[...]                                # (N, 1) int32 labels
    N, V = x.shape

    confidence = jnp.float32(1.0 - smoothing)
    smooth_val = jnp.float32(smoothing / (size - 2))

    col = jax.lax.broadcasted_iota(jnp.int32, (N, V), 1)        # class index
    tgt_b = jnp.broadcast_to(tgt, (N, V))                       # per-row target

    # scatter_(1, target, confidence) over a smooth_val-filled tensor
    true_dist = jnp.where(col == tgt_b, confidence, smooth_val)
    # true_dist[:, padding_idx] = 0   (applied AFTER the scatter, like the module)
    true_dist = jnp.where(col == padding_idx, jnp.float32(0.0), true_dist)
    # index_fill_: zero entire rows whose target is the padding index
    true_dist = jnp.where(tgt_b == padding_idx, jnp.float32(0.0), true_dist)

    # KLDivLoss(reduction='batchmean'): sum(td * (log(td) - x)) / N,
    # with zero contribution where td == 0.
    pos = true_dist > 0
    log_td = jnp.log(jnp.where(pos, true_dist, jnp.float32(1.0)))
    terms = jnp.where(pos, true_dist * (log_td - x), jnp.float32(0.0))

    loss_ref[0, 0] = jnp.sum(terms) * jnp.float32(1.0 / N)
    tdist_ref[...] = true_dist


# ----------------------------------------------------------------------------
# Wrapper
# ----------------------------------------------------------------------------
def label_smoothing(x, target, *, size, padding_idx, smoothing):
    N, V = x.shape
    assert V == size, "x.shape[1] must equal `size`"
    tgt2d = target.reshape(N, 1).astype(jnp.int32)

    kernel = functools.partial(
        label_smoothing_kernel,
        size=size, padding_idx=padding_idx, smoothing=smoothing)

    loss, true_dist = pl.pallas_call(
        kernel,
        out_shape=(jax.ShapeDtypeStruct((1, 1), jnp.float32),   # scalar loss
                   jax.ShapeDtypeStruct((N, V), jnp.float32)),  # self.true_dist
        in_specs=[
            pl.BlockSpec(memory_space=pltpu.MemorySpace.VMEM),  # x
            pl.BlockSpec(memory_space=pltpu.MemorySpace.VMEM),  # target column
        ],
        out_specs=(
            pl.BlockSpec(memory_space=pltpu.MemorySpace.SMEM),  # loss scalar
            pl.BlockSpec(memory_space=pltpu.MemorySpace.VMEM),  # true_dist
        ),
    )(x, tgt2d)
    return loss[0, 0], true_dist


# ----------------------------------------------------------------------------
# Pure-JAX reference (mirrors the PyTorch module exactly)
# ----------------------------------------------------------------------------
def reference(x, target, *, size, padding_idx, smoothing):
    N, V = x.shape
    confidence = 1.0 - smoothing
    true_dist = jnp.full((N, V), smoothing / (size - 2), jnp.float32)
    true_dist = true_dist.at[jnp.arange(N), target].set(confidence)
    true_dist = true_dist.at[:, padding_idx].set(0.0)
    true_dist = jnp.where((target == padding_idx)[:, None], 0.0, true_dist)
    pos = true_dist > 0
    log_td = jnp.log(jnp.where(pos, true_dist, 1.0))
    terms = jnp.where(pos, true_dist * (log_td - x), 0.0)
    return jnp.sum(terms) / N, true_dist


if __name__ == "__main__":
    key = jax.random.PRNGKey(0)
    k_x, k_t = jax.random.split(key)

    N, V = 8, 16            # batch rows, vocabulary size
    PADDING_IDX = 0
    SMOOTHING = 0.1

    # x: log-probabilities (KLDivLoss input convention)
    logits = jax.random.normal(k_x, (N, V), jnp.float32)
    x = jax.nn.log_softmax(logits, axis=-1)

    # targets in [1, V); force one row to be the padding index to exercise index_fill_
    target = jax.random.randint(k_t, (N,), 1, V, jnp.int32)
    target = target.at[3].set(PADDING_IDX)

    loss, true_dist = label_smoothing(
        x, target, size=V, padding_idx=PADDING_IDX, smoothing=SMOOTHING)
    loss = jax.block_until_ready(loss)

    ref_loss, ref_td = reference(
        x, target, size=V, padding_idx=PADDING_IDX, smoothing=SMOOTHING)

    assert true_dist.shape == (N, V)
    assert jnp.allclose(true_dist, ref_td, rtol=1e-6, atol=1e-6), (
        f"true_dist max abs err = {jnp.max(jnp.abs(true_dist - ref_td))}")
    assert jnp.allclose(loss, ref_loss, rtol=1e-5, atol=1e-5), (
        f"loss err: got {loss}, want {ref_loss}")

    print("KERNEL_OK")
</pallas_src>

<mosaic_0001>
module attributes {stable_mosaic.version = 11 : i64} {
  func.func @label_smoothing_kernel(%arg0: memref<8x16xf32, #tpu.memory_space<vmem>>, %arg1: memref<8x1xi32, #tpu.memory_space<vmem>>, %arg2: memref<1x1xf32, #tpu.memory_space<smem>>, %arg3: memref<8x16xf32, #tpu.memory_space<vmem>>) attributes {dimension_semantics = [], scalar_prefetch = 0 : i64, scratch_operands = 0 : i64, tpu.core_type = #tpu.core_type<tc>} {
    %c0 = arith.constant 0 : index
    %c0_0 = arith.constant 0 : index
    %0 = vector.load %arg0[%c0, %c0_0] : memref<8x16xf32, #tpu.memory_space<vmem>>, vector<8x16xf32>
    %c0_1 = arith.constant 0 : index
    %c0_2 = arith.constant 0 : index
    %1 = vector.load %arg1[%c0_1, %c0_2] : memref<8x1xi32, #tpu.memory_space<vmem>>, vector<8x1xi32>
    %2 = tpu.iota {dimensions = array<i32: 1>} : vector<8x16xi32>
    %3 = vector.shape_cast %1 : vector<8x1xi32> to vector<8x1xi32>
    %4 = vector.broadcast %3 : vector<8x1xi32> to vector<8x16xi32>
    %5 = arith.cmpi eq, %2, %4 : vector<8x16xi32>
    %cst = arith.constant 0.899999976 : f32
    %cst_3 = arith.constant 0.00714285718 : f32
    %6 = vector.broadcast %cst : f32 to vector<8x16xf32>
    %7 = vector.broadcast %cst_3 : f32 to vector<8x16xf32>
    %8 = arith.select %5, %6, %7 : vector<8x16xi1>, vector<8x16xf32>
    %c0_i32 = arith.constant 0 : i32
    %9 = vector.broadcast %c0_i32 : i32 to vector<8x16xi32>
    %10 = arith.cmpi eq, %2, %9 : vector<8x16xi32>
    %cst_4 = arith.constant 0.000000e+00 : f32
    %11 = vector.broadcast %cst_4 : f32 to vector<8x16xf32>
    %12 = arith.select %10, %11, %8 : vector<8x16xi1>, vector<8x16xf32>
    %c0_i32_5 = arith.constant 0 : i32
    %13 = vector.broadcast %c0_i32_5 : i32 to vector<8x16xi32>
    %14 = arith.cmpi eq, %4, %13 : vector<8x16xi32>
    %cst_6 = arith.constant 0.000000e+00 : f32
    %15 = vector.broadcast %cst_6 : f32 to vector<8x16xf32>
    %16 = arith.select %14, %15, %12 : vector<8x16xi1>, vector<8x16xf32>
    %cst_7 = arith.constant 0.000000e+00 : f32
    %17 = vector.broadcast %cst_7 : f32 to vector<8x16xf32>
    %18 = arith.cmpf ogt, %16, %17 : vector<8x16xf32>
    %cst_8 = arith.constant 1.000000e+00 : f32
    %19 = vector.broadcast %cst_8 : f32 to vector<8x16xf32>
    %20 = arith.select %18, %16, %19 : vector<8x16xi1>, vector<8x16xf32>
    %21 = math.log %20 : vector<8x16xf32>
    %22 = arith.subf %21, %0 : vector<8x16xf32>
    %23 = arith.mulf %16, %22 : vector<8x16xf32>
    %cst_9 = arith.constant 0.000000e+00 : f32
    %24 = vector.broadcast %cst_9 : f32 to vector<8x16xf32>
    %25 = arith.select %18, %23, %24 : vector<8x16xi1>, vector<8x16xf32>
    %26 = vector.shape_cast %25 : vector<8x16xf32> to vector<1x8x16xf32>
    %cst_10 = arith.constant dense<0.000000e+00> : vector<1xf32>
    %27 = vector.multi_reduction <add>, %26, %cst_10 [1, 2] : vector<1x8x16xf32> to vector<1xf32>
    %28 = vector.shape_cast %27 : vector<1xf32> to vector<1x1x1xf32>
    %29 = vector.extract %28[0, 0, 0] : f32 from vector<1x1x1xf32>
    %cst_11 = arith.constant 1.250000e-01 : f32
    %30 = arith.mulf %29, %cst_11 : f32
    %c0_12 = arith.constant 0 : index
    %c0_13 = arith.constant 0 : index
    %31 = memref.load %arg2[%c0_12, %c0_13] : memref<1x1xf32, #tpu.memory_space<smem>>
    memref.store %30, %arg2[%c0_12, %c0_13] : memref<1x1xf32, #tpu.memory_space<smem>>
    %c0_14 = arith.constant 0 : index
    %c0_15 = arith.constant 0 : index
    %32 = vector.load %arg3[%c0_14, %c0_15] : memref<8x16xf32, #tpu.memory_space<vmem>>, vector<8x16xf32>
    tpu.vector_store %arg3[%c0_14, %c0_15], %16 {strides = array<i32>} : memref<8x16xf32, #tpu.memory_space<vmem>>, vector<8x16xf32>,
    return
  }
}

</mosaic_0001>

<llo_original>
// kernel: tpu_custom_call.1
$region0: #{tpu_custom_call.1}
  #allocation0 [shape = 'u32[]', space=smem, size = 0x4, offset = 0x4, fixed_abs, tag = 'smem constant byte address 0x4 - core index']
  #allocation1 [shape = 'u32[72,128]{1,0:T(1,128)}', space=vmem, size = 0x9000, scoped, tag = 'internal scratch']
  %s0 = inlined_call_operand.vmem [shape: f32[8,16], index: 0, kind: input, shape index: {}]
  %s1 = inlined_call_operand.vmem [shape: s32[8,1], index: 1, kind: input, shape index: {}]
  %s2 = inlined_call_operand.hbm [shape: f32[1,1], index: 2, kind: output, shape index: {0}]
  %s3 = inlined_call_operand.hbm [shape: f32[8,16], index: 3, kind: output, shape index: {1}]
  %4 = xla_tuple %s2, %s3
  %s5 = sld [smem:[#allocation0]]
  $region26: #{tpu_custom_call.1} parent=0
    _
  %s7 = ssub.s32 1, %s5
  %s8 = scalar_select 0, %s7, %s5
  $region1: #{tpu_custom_call.1} parent=0
    #allocation2 [shape = 'u8[512]{0}', space=smem, size = 0x200, scoped, tag = 'output window, operand 0, single buffered']
    #allocation3 [shape = 's32[1]{0}', space=sflag, size = 0x4, scoped, tag = 'scoped memory for tpu_custom_call.1']
    #allocation4 [shape = 's32[1]{0}', space=sflag, size = 0x4, scoped, tag = 'scoped memory for tpu_custom_call.1']
    #allocation5 [shape = 'u8[4096]{0}', space=vmem, size = 0x1000, scoped, tag = 'output window, operand 1, single buffered']
    %9 = vsyncpa [#allocation4], 0
    %10 = vsyncpa [#allocation3], 0
    // Predicated region
    $region2: #{tpu_custom_call.1} parent=1 // pred_check
      _
    $region3: #{tpu_custom_call.1} parent=1 // pred_check_branch
      %12 = sbr.rel (0) target = $region5
    $region4: #{tpu_custom_call.1} parent=1 // pred_region
      _
    $region5: #{tpu_custom_call.1} parent=1 // pred_fallthru
      _
    // Predicated region
    $region6: #{tpu_custom_call.1} parent=1 // pred_check
      _
    $region7: #{tpu_custom_call.1} parent=1 // pred_check_branch
      %14 = sbr.rel (0) target = $region9
    $region8: #{tpu_custom_call.1} parent=1 // pred_region
      _
    $region9: #{tpu_custom_call.1} parent=1 // pred_fallthru
      _
    %v15 = vld [vmem:[%s0] sm:$0xff]
    %v16 = vld [vmem:[%s1] sm:$0xff]
    %v17 = vlaneseq
    %v18 = vand.u32 %v17, 127
    %19 = vset.pattern.permute.xlu0 0
    %20 = vperm.xlu0 %19, %v16
    %v21 = vpop.permute.xlu0 %20
    %vm22 = vcmp.eq.s32.totalorder %v18, %v21
    %v23 = vsel %vm22, 0.9, 0.007142857
    %vm24 = vcmp.eq.s32.totalorder %v18, 0
    %v25 = vsel %vm24, 0.0, %v23
    %vm26 = vcmp.eq.s32.totalorder %v21, 0
    %v27 = vsel %vm26, 0.0, %v25
    %vm28 = vcmp.gt.f32.partialorder %v27, 0.0
    %v29 = vsel %vm28, %v27, 1.0
    %v30 = vlog2.pop %v29
    %v31 = vmul.f32 %v30, 0.6931472
    %v32 = vsub.f32 %v31, %v15
    %v33 = vmul.f32 %v27, %v32
    %v34 = vsel %vm28, %v33, 0.0
    %vm35 = vcmask 130048
    %v36 = vsel %vm35, %v34, 0.0
    %37 = vadd.xlane.f32.xlu0 %v36
    %v38 = vpop.xlane.xlu0 %37
    %v39 = vrot.slane %v38, 4
    %v40 = vadd.f32 %v38, %v39
    %v41 = vrot.slane %v40, 2
    %v42 = vadd.f32 %v40, %v41
    %v43 = vrot.slane %v42, 1
    %v44 = vadd.f32 %v42, %v43
    %s45 = vtos %v44
    %s46 = smul.f32 %s45, 0.125
    %s47 = scalar_lea.smem [#allocation2], 0
    %48 = sst [smem:[%s47]] %s46
    %49 = vst.msk [vmem:[#allocation5] sm:$0xff] %vm35, %v27
    // Predicated region
    $region10: #{tpu_custom_call.1} parent=1 // pred_check
      _
    $region11: #{tpu_custom_call.1} parent=1 // pred_check_branch
      %51 = sbr.rel (0) target = $region13
    $region12: #{tpu_custom_call.1} parent=1 // pred_region
      %53 = vsyncadd [#allocation4], 0
      %s55 = sshll.u32 %s2, 4
      %s56 = int_to_ptr.hbm [resolvable:$true] %s55
      %58 = dma.smem_to_hbm [#allocation2], 16, %s56, [#allocation4]
    $region13: #{tpu_custom_call.1} parent=1 // pred_fallthru
      _
    // Predicated region
    $region14: #{tpu_custom_call.1} parent=1 // pred_check
      _
    $region15: #{tpu_custom_call.1} parent=1 // pred_check_branch
      %60 = sbr.rel (0) target = $region17
    $region16: #{tpu_custom_call.1} parent=1 // pred_region
      %62 = vsyncadd [#allocation3], 0
      %s64 = sshll.u32 [#allocation5], 4
      %s65 = int_to_ptr.vmem [resolvable:$true] %s64
      %s66 = sshll.u32 %s3, 4
      %s67 = int_to_ptr.hbm [resolvable:$true] %s66
      %69 = dma.vmem_to_hbm [thread:$0]  %s65, 128, %s67, [#allocation3]
    $region17: #{tpu_custom_call.1} parent=1 // pred_fallthru
      _
    // Predicated region
    $region18: #{tpu_custom_call.1} parent=1 // pred_check
      _
    $region19: #{tpu_custom_call.1} parent=1 // pred_check_branch
      %71 = sbr.rel (0) target = $region21
    $region20: #{tpu_custom_call.1} parent=1 // pred_region
      %73 = dma.done [#allocation4], 16
    $region21: #{tpu_custom_call.1} parent=1 // pred_fallthru
      _
    // Predicated region
    $region22: #{tpu_custom_call.1} parent=1 // pred_check
      _
    $region23: #{tpu_custom_call.1} parent=1 // pred_check_branch
      %75 = sbr.rel (0) target = $region25
    $region24: #{tpu_custom_call.1} parent=1 // pred_region
      %77 = dma.done [#allocation3], 128
    $region25: #{tpu_custom_call.1} parent=1 // pred_fallthru
      _
    %78 = sfence
    %79 = vsyncpa [#allocation3], 1
    %80 = vsyncpa [#allocation4], 1

</llo_original>
